<compile_context>
chip_gen: v5e
topology: v5e:2x2
jax: 0.10.0
libtpu: 0.0.40
codegen_flags: <defaults>
</compile_context>

<pallas_src>
import functools

import jax
import jax.numpy as jnp
from jax import lax
from jax.experimental import pallas as pl
from jax.experimental.pallas import tpu as pltpu


def _cdiv(a, b):
    return -(-a // b)


def _round_up(x, m):
    return _cdiv(x, m) * m


# --------------------------------------------------------------------------
# Kernels
# --------------------------------------------------------------------------
def _fc_kernel_fused(x_ref, w_ref, b_ref, o_ref, *, activate, precision):
    # Fast path: full K and full N resident in VMEM -> no reduction axis,
    # no accumulator scratch, single bias-add + cast per output tile.
    x = x_ref[...]
    if activate:
        x = jnp.tanh(x)
    acc = jnp.dot(x, w_ref[...], preferred_element_type=jnp.float32,
                  precision=precision)
    o_ref[...] = (acc + b_ref[...].astype(jnp.float32)).astype(o_ref.dtype)


def _fc_kernel_tiled(x_ref, w_ref, b_ref, o_ref, acc_ref, *, activate, precision):
    # General (M, N, K) grid, K innermost, f32 VMEM accumulator.
    k = pl.program_id(2)

    @pl.when(k == 0)
    def _():
        acc_ref[...] = jnp.zeros_like(acc_ref)

    x = x_ref[...]
    if activate:
        # Only reached when grid_n == 1, so each x element is activated once.
        x = jnp.tanh(x)

    acc_ref[...] += jnp.dot(x, w_ref[...], preferred_element_type=jnp.float32,
                            precision=precision)

    @pl.when(k == pl.num_programs(2) - 1)
    def _():
        # Bias add + downcast exactly once per output tile.
        o_ref[...] = (acc_ref[...] + b_ref[...].astype(jnp.float32)).astype(o_ref.dtype)


# --------------------------------------------------------------------------
# Tile selection
# --------------------------------------------------------------------------
def _vmem_capacity_bytes():
    try:
        cap = getattr(pltpu.get_tpu_info(), "vmem_capacity_bytes", None)
        if cap:
            return int(cap)
    except Exception:
        pass
    return 64 * 1024 * 1024  # v7x-safe fallback


def _tile_bytes(tm, tk, tn, in_item, out_item):
    # Double-buffered x / w / out tiles + f32 accumulator + bias.
    return (2 * tm * tk * in_item +
            2 * tk * tn * in_item +
            2 * tm * tn * out_item +
            tm * tn * 4 +
            2 * tn * 4)


def _balance(dim, tile, align):
    # Shrink `tile` so round_up(dim, tile) has minimal padding (keeps the same
    # or smaller grid step count, never grows VMEM usage).
    if tile >= dim:
        return max(align, _round_up(dim, align))
    n = _cdiv(dim, tile)
    return _round_up(_cdiv(dim, n), align)


def _select_tiles(mp8, kp, np_, in_item, out_item, budget):
    tm = min(mp8, 1024)
    tn = min(np_, 1024)
    tk = min(kp, 2048)
    # Shrink until the double-buffered working set fits the VMEM budget.
    # Prefer shrinking K (only grid-step overhead) before the output tile
    # (which sets arithmetic intensity).
    while _tile_bytes(tm, tk, tn, in_item, out_item) > budget:
        if tk > 512:
            tk = max(512, _round_up(tk // 2, 128))
        elif tm >= tn and tm > 128:
            tm = max(128, _round_up(tm // 2, 8))
        elif tn > 128:
            tn = max(128, _round_up(tn // 2, 128))
        else:
            break
    # Keep >=2 parallel output blocks on non-tiny problems so both v7x
    # TensorCores get work (no effect on single-TC v5e/v6e).
    if tm >= mp8 and tn >= np_ and mp8 >= 256:
        tm = _cdiv(mp8, 2)
    tm = _balance(mp8, tm, 8)
    tk = _balance(kp, tk, 128)
    tn = _balance(np_, tn, 128)
    return tm, tk, tn


# --------------------------------------------------------------------------
# Wrapper
# --------------------------------------------------------------------------
def fc_layer(x, weight, bias, use_activation=True, precision=None):
    """Pallas FCLayer forward (eval mode).

    x:      (..., input_dim)
    weight: (output_dim, input_dim)   -- PyTorch nn.Linear convention
    bias:   (output_dim,)
    precision: optional lax.Precision for the matmul (pass
               lax.Precision.HIGHEST for strict f32 accuracy at large K).
    """
    # TODO(synk): training-mode dropout (rate > 0) would need pltpu.prng_seed /
    # pltpu.stateful_bernoulli; this matches eval / dropout_rate=0.0 semantics.
    in_dim = x.shape[-1]
    out_dim = weight.shape[0]
    lead = x.shape[:-1]
    m = 1
    for d in lead:
        m *= d

    in_item = jnp.dtype(x.dtype).itemsize
    out_item = in_item

    vmem_cap = _vmem_capacity_bytes()
    vmem_limit = max(32 * 1024 * 1024,
                     min(int(vmem_cap * 0.85), vmem_cap - (4 << 20)))

    mp8 = _round_up(m, 8)
    kp0 = _round_up(in_dim, 128)
    np0 = _round_up(out_dim, 128)

    tm, tk, tn = _select_tiles(mp8, kp0, np0, in_item, out_item,
                               budget=int(vmem_limit * 0.75))

    mp = _round_up(m, tm)
    kp = _round_up(kp0, tk)
    np_ = _round_up(np0, tn)

    grid_m = mp // tm
    grid_n = np_ // tn
    grid_k = kp // tk

    # Hoist tanh out of the matmul grid whenever it would otherwise be
    # recomputed once per N tile; fused by XLA with the pad below.
    wrapper_act = use_activation and grid_n > 1
    kernel_act = use_activation and grid_n == 1

    x2 = x.reshape(m, in_dim)
    if wrapper_act:
        x2 = jnp.tanh(x2)
    if (mp, kp) != (m, in_dim):
        # Padding is inert: tanh(0) = 0, padded K columns hit zero weights,
        # padded M rows are sliced away below.
        x2 = jnp.pad(x2, ((0, mp - m), (0, kp - in_dim)))

    # One-time (K, N) weight layout: K on sublanes, N on lanes -> canonical
    # tiled-matmul feed, no per-tile XLU transpose competing with vmatmul.
    w2 = weight.T
    if (kp, np_) != (in_dim, out_dim):
        w2 = jnp.pad(w2, ((0, kp - in_dim), (0, np_ - out_dim)))

    b2 = bias.reshape(1, out_dim)
    if np_ != out_dim:
        b2 = jnp.pad(b2, ((0, 0), (0, np_ - out_dim)))

    cost = pl.CostEstimate(
        flops=2 * mp * np_ * kp,
        transcendentals=(mp * kp) if kernel_act else 0,
        bytes_accessed=(mp * kp + np_ * kp) * in_item + (np_ + mp * np_) * out_item)

    if grid_k == 1 and grid_n == 1:
        # Small-layer fast path: weight + bias stay resident in VMEM, 1-D grid
        # over M, no reduction axis, no accumulator scratch, no pl.when.
        kernel = functools.partial(_fc_kernel_fused, activate=kernel_act,
                                   precision=precision)
        y2 = pl.pallas_call(
            kernel,
            out_shape=jax.ShapeDtypeStruct((mp, np_), x.dtype),
            grid_spec=pltpu.PrefetchScalarGridSpec(
                num_scalar_prefetch=0,
                grid=(grid_m,),
                in_specs=[
                    pl.BlockSpec((tm, kp), lambda i: (i, 0)),    # x tile
                    pl.BlockSpec((kp, np_), lambda i: (0, 0)),   # full (K,N) weight
                    pl.BlockSpec((1, np_), lambda i: (0, 0)),    # bias
                ],
                out_specs=pl.BlockSpec((tm, np_), lambda i: (i, 0)),
            ),
            compiler_params=pltpu.CompilerParams(
                dimension_semantics=("parallel",),
                vmem_limit_bytes=vmem_limit),
            cost_estimate=cost,
        )(x2, w2, b2)
    else:
        kernel = functools.partial(_fc_kernel_tiled, activate=kernel_act,
                                   precision=precision)
        y2 = pl.pallas_call(
            kernel,
            out_shape=jax.ShapeDtypeStruct((mp, np_), x.dtype),
            grid_spec=pltpu.PrefetchScalarGridSpec(
                num_scalar_prefetch=0,
                grid=(grid_m, grid_n, grid_k),
                in_specs=[
                    pl.BlockSpec((tm, tk), lambda i, j, k: (i, k)),   # x tile
                    pl.BlockSpec((tk, tn), lambda i, j, k: (k, j)),   # W^T tile (K,N)
                    pl.BlockSpec((1, tn), lambda i, j, k: (0, j)),    # bias tile
                ],
                out_specs=pl.BlockSpec((tm, tn), lambda i, j, k: (i, j)),
                scratch_shapes=[pltpu.VMEM((tm, tn), jnp.float32)],
            ),
            compiler_params=pltpu.CompilerParams(
                dimension_semantics=("parallel", "parallel", "arbitrary"),
                vmem_limit_bytes=vmem_limit),
            cost_estimate=cost,
        )(x2, w2, b2)

    return y2[:m, :out_dim].reshape(*lead, out_dim)


if __name__ == "__main__":
    key = jax.random.PRNGKey(0)
    kx, kw, kb = jax.random.split(key, 3)

    batch, seq, input_dim, output_dim = 2, 8, 32, 16

    x = jax.random.normal(kx, (batch, seq, input_dim), dtype=jnp.float32)
    # Deterministic "nn.Linear" params (uniform like PyTorch default init).
    bound = 1.0 / (input_dim ** 0.5)
    weight = jax.random.uniform(kw, (output_dim, input_dim),
                                minval=-bound, maxval=bound, dtype=jnp.float32)
    bias = jax.random.uniform(kb, (output_dim,),
                              minval=-bound, maxval=bound, dtype=jnp.float32)

    # With activation (default FCLayer config).
    y = fc_layer(x, weight, bias, use_activation=True)
    jax.block_until_ready(y)
    y_ref = jnp.tanh(x) @ weight.T + bias
    assert y.shape == (batch, seq, output_dim)
    assert jnp.allclose(y, y_ref, atol=1e-5, rtol=1e-5)

    # Without activation (plain dropout -> Linear path).
    y2 = fc_layer(x, weight, bias, use_activation=False)
    jax.block_until_ready(y2)
    y2_ref = x @ weight.T + bias
    assert jnp.allclose(y2, y2_ref, atol=1e-5, rtol=1e-5)

    print("KERNEL_OK")
</pallas_src>

<mosaic_0001>
module attributes {stable_mosaic.version = 11 : i64} {
  func.func @_fc_kernel_fused(%arg0: i32, %arg1: memref<16x128xf32, #tpu.memory_space<vmem>>, %arg2: memref<128x128xf32, #tpu.memory_space<vmem>>, %arg3: memref<1x128xf32, #tpu.memory_space<vmem>>, %arg4: memref<16x128xf32, #tpu.memory_space<vmem>>) attributes {dimension_semantics = [#tpu.dimension_semantics<parallel>], iteration_bounds = array<i64: 1>, scalar_prefetch = 0 : i64, scratch_operands = 0 : i64, tpu.core_type = #tpu.core_type<tc>, window_params = [{transform_indices = @transform_0, window_bounds = array<i64: 16, 128>}, {pipeline_mode = #tpu.pipeline_mode<synchronous>, transform_indices = @transform_1, window_bounds = array<i64: 128, 128>}, {pipeline_mode = #tpu.pipeline_mode<synchronous>, transform_indices = @transform_2, window_bounds = array<i64: 1, 128>}, {transform_indices = @transform_3, window_bounds = array<i64: 16, 128>}]} {
    %c0 = arith.constant 0 : index
    %c0_0 = arith.constant 0 : index
    %0 = vector.load %arg1[%c0, %c0_0] : memref<16x128xf32, #tpu.memory_space<vmem>>, vector<16x128xf32>
    %1 = math.tanh %0 : vector<16x128xf32>
    %c0_1 = arith.constant 0 : index
    %c0_2 = arith.constant 0 : index
    %2 = vector.load %arg2[%c0_1, %c0_2] : memref<128x128xf32, #tpu.memory_space<vmem>>, vector<128x128xf32>
    %cst = arith.constant dense<0.000000e+00> : vector<16x128xf32>
    %3 = tpu.matmul %1, %2, %cst {dimension_numbers = #tpu.dot_dimension_numbers<[1], [0], [0], [1], [0, 0, 1, 1], [], []>} : vector<16x128xf32>, vector<128x128xf32>, vector<16x128xf32> -> vector<16x128xf32>
    %c0_3 = arith.constant 0 : index
    %c0_4 = arith.constant 0 : index
    %4 = vector.load %arg3[%c0_3, %c0_4] : memref<1x128xf32, #tpu.memory_space<vmem>>, vector<1x128xf32>
    %5 = vector.broadcast %4 : vector<1x128xf32> to vector<16x128xf32>
    %6 = arith.addf %3, %5 : vector<16x128xf32>
    %c0_5 = arith.constant 0 : index
    %c0_6 = arith.constant 0 : index
    %7 = vector.load %arg4[%c0_5, %c0_6] : memref<16x128xf32, #tpu.memory_space<vmem>>, vector<16x128xf32>
    tpu.vector_store %arg4[%c0_5, %c0_6], %6 {strides = array<i32>} : memref<16x128xf32, #tpu.memory_space<vmem>>, vector<16x128xf32>,
    return
  }
  func.func @transform_0(%arg0: i32) -> (i32, i32) {
    %c0_i32 = arith.constant 0 : i32
    %c0_i32_0 = arith.constant 0 : i32
    return %arg0, %c0_i32 : i32, i32
  }
  func.func @transform_1(%arg0: i32) -> (i32, i32) {
    %c0_i32 = arith.constant 0 : i32
    %c0_i32_0 = arith.constant 0 : i32
    %c0_i32_1 = arith.constant 0 : i32
    return %c0_i32, %c0_i32_0 : i32, i32
  }
  func.func @transform_2(%arg0: i32) -> (i32, i32) {
    %c0_i32 = arith.constant 0 : i32
    %c0_i32_0 = arith.constant 0 : i32
    %c0_i32_1 = arith.constant 0 : i32
    return %c0_i32, %c0_i32_0 : i32, i32
  }
  func.func @transform_3(%arg0: i32) -> (i32, i32) {
    %c0_i32 = arith.constant 0 : i32
    %c0_i32_0 = arith.constant 0 : i32
    return %arg0, %c0_i32 : i32, i32
  }
}

</mosaic_0001>

<llo_original>
// kernel: tpu_custom_call.1
$region0: #{tpu_custom_call.1}
  #allocation0 [shape = 'u32[]', space=smem, size = 0x4, offset = 0x4, fixed_abs, tag = 'smem constant byte address 0x4 - core index']
  #allocation1 [shape = 'u32[72,128]{1,0:T(1,128)}', space=vmem, size = 0x9000, scoped, tag = 'internal scratch']
  %s0 = inlined_call_operand.hbm [shape: f32[16,128], index: 0, kind: input, shape index: {}]
  %s1 = inlined_call_operand.hbm [shape: f32[128,128], index: 1, kind: input, shape index: {}]
  %s2 = inlined_call_operand.vmem [shape: f32[1,128], index: 2, kind: input, shape index: {}]
  %s3 = inlined_call_operand.hbm [shape: f32[16,128], index: 3, kind: output, shape index: {}]
  %s4 = sld [smem:[#allocation0]]
  $region30: #{tpu_custom_call.1} parent=0
    _
  %s6 = ssub.s32 1, %s4
  %s7 = scalar_select 0, %s6, %s4
  $region1: #{tpu_custom_call.1} parent=0
    #allocation2 [shape = 'u8[8192]{0}', space=vmem, size = 0x2000, scoped, tag = 'input window, operand 0, single buffered']
    #allocation3 [shape = 's32[1]{0}', space=sflag, size = 0x4, scoped, tag = 'scoped memory for tpu_custom_call.1']
    #allocation4 [shape = 's32[1]{0}', space=sflag, size = 0x4, scoped, tag = 'scoped memory for tpu_custom_call.1']
    #allocation5 [shape = 'u8[65536]{0}', space=vmem, size = 0x10000, scoped, tag = 'input window, operand 1, single buffered']
    #allocation6 [shape = 's32[1]{0}', space=sflag, size = 0x4, scoped, tag = 'scoped memory for tpu_custom_call.1']
    #allocation7 [shape = 'u8[8192]{0}', space=vmem, size = 0x2000, scoped, tag = 'output window, operand 0, single buffered']
    %8 = vsyncpa [#allocation3], 0
    %9 = vsyncpa [#allocation6], 0
    %10 = vsyncpa [#allocation4], 0
    // Predicated region
    $region2: #{tpu_custom_call.1} parent=1 // pred_check
      _
    $region3: #{tpu_custom_call.1} parent=1 // pred_check_branch
      %12 = sbr.rel (0) target = $region5
    $region4: #{tpu_custom_call.1} parent=1 // pred_region
      %14 = vsyncadd [#allocation3], 0
      %s15 = sshll.u32 %s0, 4
      %s16 = int_to_ptr.hbm [resolvable:$true] %s15
      %s17 = sshll.u32 [#allocation2], 4
      %s18 = int_to_ptr.vmem [resolvable:$true] %s17
      %23 = dma.hbm_to_vmem [thread:$0]  %s16, 256, %s18, [#allocation3], 128, 128, 8
    $region5: #{tpu_custom_call.1} parent=1 // pred_fallthru
      _
    // Predicated region
    $region6: #{tpu_custom_call.1} parent=1 // pred_check
      _
    $region7: #{tpu_custom_call.1} parent=1 // pred_check_branch
      %25 = sbr.rel (0) target = $region9
    $region8: #{tpu_custom_call.1} parent=1 // pred_region
      %27 = vsyncadd [#allocation6], 0
      %s28 = sshll.u32 %s1, 4
      %s29 = int_to_ptr.hbm [resolvable:$true] %s28
      %s30 = sshll.u32 [#allocation5], 4
      %s31 = int_to_ptr.vmem [resolvable:$true] %s30
      %36 = dma.hbm_to_vmem [thread:$0]  %s29, 2048, %s31, [#allocation6], 128, 128, 8
    $region9: #{tpu_custom_call.1} parent=1 // pred_fallthru
      _
    // Predicated region
    $region10: #{tpu_custom_call.1} parent=1 // pred_check
      _
    $region11: #{tpu_custom_call.1} parent=1 // pred_check_branch
      %38 = sbr.rel (0) target = $region13
    $region12: #{tpu_custom_call.1} parent=1 // pred_region
      _
    $region13: #{tpu_custom_call.1} parent=1 // pred_fallthru
      _
    // Predicated region
    $region14: #{tpu_custom_call.1} parent=1 // pred_check
      _
    $region15: #{tpu_custom_call.1} parent=1 // pred_check_branch
      %40 = sbr.rel (0) target = $region17
    $region16: #{tpu_custom_call.1} parent=1 // pred_region
      %42 = dma.done [#allocation3], 256
    $region17: #{tpu_custom_call.1} parent=1 // pred_fallthru
      _
    // Predicated region
    $region18: #{tpu_custom_call.1} parent=1 // pred_check
      _
    $region19: #{tpu_custom_call.1} parent=1 // pred_check_branch
      %44 = sbr.rel (0) target = $region21
    $region20: #{tpu_custom_call.1} parent=1 // pred_region
      %46 = dma.done [#allocation6], 2048
    $region21: #{tpu_custom_call.1} parent=1 // pred_fallthru
      _
    %v47 = vld [vmem:[#allocation2] sm:$0xff]
    %v48 = vld [vmem:[#allocation2 + $0x8] sm:$0xff]
    %v49 = vtanh.pop %v47
    %v50 = vtanh.pop %v48
    %v51 = vld [vmem:[#allocation5] sm:$0xff]
    %v52 = vld [vmem:[#allocation5 + $0x8] sm:$0xff]
    %v53 = vld [vmem:[#allocation5 + $0x10] sm:$0xff]
    %v54 = vld [vmem:[#allocation5 + $0x18] sm:$0xff]
    %v55 = vld [vmem:[#allocation5 + $0x20] sm:$0xff]
    %v56 = vld [vmem:[#allocation5 + $0x28] sm:$0xff]
    %v57 = vld [vmem:[#allocation5 + $0x30] sm:$0xff]
    %v58 = vld [vmem:[#allocation5 + $0x38] sm:$0xff]
    %v59 = vld [vmem:[#allocation5 + $0x40] sm:$0xff]
    %v60 = vld [vmem:[#allocation5 + $0x48] sm:$0xff]
    %v61 = vld [vmem:[#allocation5 + $0x50] sm:$0xff]
    %v62 = vld [vmem:[#allocation5 + $0x58] sm:$0xff]
    %v63 = vld [vmem:[#allocation5 + $0x60] sm:$0xff]
    %v64 = vld [vmem:[#allocation5 + $0x68] sm:$0xff]
    %v65 = vld [vmem:[#allocation5 + $0x70] sm:$0xff]
    %v66 = vld [vmem:[#allocation5 + $0x78] sm:$0xff]
    %v67 = vld [vmem:[%s2] sm:$0x1]
    %v69 = vperm.slane %v67, 0
    %71 = vmatpush.msra.mxu0 %v66
    %72 = vmatpush.msra.mxu0 %v65
    %73 = vmatpush.msra.mxu0 %v64
    %74 = vmatpush.msra.mxu0 %v63
    %75 = vmatpush.msra.mxu0 %v62
    %76 = vmatpush.msra.mxu0 %v61
    %77 = vmatpush.msra.mxu0 %v60
    %78 = vmatpush.msra.mxu0 %v59
    %79 = vmatpush.msra.mxu0 %v58
    %80 = vmatpush.msra.mxu0 %v57
    %81 = vmatpush.msra.mxu0 %v56
    %82 = vmatpush.msra.mxu0 %v55
    %83 = vmatpush.msra.mxu0 %v54
    %84 = vmatpush.msra.mxu0 %v53
    %85 = vmatpush.msra.mxu0 %v52
    %86 = vmatpush.msra.mxu0 %v51
    %87 = vmatmul.f32.gmra.mxu0 %v49
    %v88 = vpop.f32.mrf.mxu0
    %v89 = vadd.f32 %v69, %v88
    %90 = vmatmul.f32.gmra.mxu0 %v50
    %v91 = vpop.f32.mrf.mxu0
    %v92 = vadd.f32 %v69, %v91
    %93 = vdwg.mxu0
    %94 = vst [vmem:[#allocation7] sm:$0xff] %v89
    %95 = vst [vmem:[#allocation7 + $0x8] sm:$0xff] %v92
    // Predicated region
    $region22: #{tpu_custom_call.1} parent=1 // pred_check
      _
    $region23: #{tpu_custom_call.1} parent=1 // pred_check_branch
      %97 = sbr.rel (0) target = $region25
    $region24: #{tpu_custom_call.1} parent=1 // pred_region
      %99 = vsyncadd [#allocation4], 0
      %s100 = sshll.u32 [#allocation7], 4
      %s101 = int_to_ptr.vmem [resolvable:$true] %s100
      %s102 = sshll.u32 %s3, 4
      %s103 = int_to_ptr.hbm [resolvable:$true] %s102
      %108 = dma.vmem_to_hbm [thread:$0]  %s101, 256, %s103, [#allocation4], 128, 128, 8
    $region25: #{tpu_custom_call.1} parent=1 // pred_fallthru
      _
    // Predicated region
    $region26: #{tpu_custom_call.1} parent=1 // pred_check
      _
    $region27: #{tpu_custom_call.1} parent=1 // pred_check_branch
      %110 = sbr.rel (0) target = $region29
    $region28: #{tpu_custom_call.1} parent=1 // pred_region
      %112 = dma.done [#allocation4], 256
    $region29: #{tpu_custom_call.1} parent=1 // pred_fallthru
      _
    %113 = vsyncpa [#allocation3], 1
    %114 = vsyncpa [#allocation6], 1
    %115 = vsyncpa [#allocation4], 1

</llo_original>
